<compile_context>
chip_gen: v7x
topology: tpu7x:2x2x1
jax: 0.10.0
libtpu: 0.0.40
codegen_flags: <defaults>
</compile_context>

<pallas_src>
import jax
import jax.numpy as jnp
from jax.experimental import pallas as pl
from jax.experimental.pallas import tpu as pltpu


def _one_layer_kernel(x_ref, w_ref, o_ref):
    # x_ref: (tm, P) in the input dtype, w_ref: (1, P) f32, o_ref: (tm, 1) f32.
    xv = x_ref[...].astype(jnp.float32)                          # in-vreg upcast (VPU)
    logits = jnp.sum(xv * w_ref[...], axis=-1, keepdims=True)    # VPU mul + XLU lane reduce
    o_ref[...] = jax.nn.sigmoid(logits).astype(o_ref.dtype)      # EUP exp/recip


def _round_up(x, m):
    return ((x + m - 1) // m) * m


def _vmem_capacity_bytes():
    """Physical VMEM of the current chip; conservative fallback if unavailable."""
    try:
        return int(pltpu.get_tpu_info().vmem_capacity_bytes)
    except Exception:
        return 64 * 1024 * 1024  # assume v7x-sized VMEM (smallest generation)


def _grid_semantics():
    """CORE_PARALLEL on v7x (2 TCs/chip); plain 'parallel' elsewhere."""
    try:
        kind = jax.devices()[0].device_kind.lower()
    except Exception:
        kind = ""
    core_parallel = getattr(pltpu, "CORE_PARALLEL", None)
    if core_parallel is not None and ("v7" in kind or "7x" in kind):
        # TODO(synk): verify in an xprof trace that both TensorCores are active.
        return (core_parallel,)
    return ("parallel",)


def _choose_row_tile(batch, p, x_itemsize, vmem_cap):
    """Largest row tile whose double-buffered footprint fits the data budget."""
    padded_p = _round_up(p, 128)                          # lane padding of the x block
    # Per-row bytes, double-buffered: x tile (input dtype) + (tm,1) f32 output
    # padded to 128 lanes.
    per_row = (padded_p * x_itemsize + 128 * 4) * 2
    budget = vmem_cap // 4                                # ~32 MiB v5e/v6e, ~16 MiB v7x
    tm = max(8, min(budget // per_row, 8192))
    tm = (tm // 128) * 128 if tm >= 128 else (tm // 8) * 8
    tm = min(tm, _round_up(batch, 8))                     # never bigger than one batch
    return max(8, tm)


def one_layer_forward(x, weight, *, block_rows=None):
    """x: (B, P) float32 or bfloat16, weight: (1, P) (PyTorch nn.Linear layout)."""
    B, P = x.shape
    w = weight.astype(jnp.float32).reshape(1, P)          # tiny; resident in VMEM

    x_itemsize = jnp.dtype(x.dtype).itemsize
    vmem_cap = _vmem_capacity_bytes()
    tm = block_rows if block_rows is not None else _choose_row_tile(
        B, P, x_itemsize, vmem_cap)
    tm = max(8, (tm // 8) * 8)

    cost = pl.CostEstimate(
        flops=2 * B * P,
        transcendentals=B,
        bytes_accessed=B * P * x_itemsize + B * 4 + P * 4,
    )

    out = pl.pallas_call(
        _one_layer_kernel,
        out_shape=jax.ShapeDtypeStruct((B, 1), jnp.float32),
        grid_spec=pltpu.PrefetchScalarGridSpec(
            num_scalar_prefetch=0,
            grid=(pl.cdiv(B, tm),),                       # partial last block is masked
            in_specs=[
                pl.BlockSpec((tm, P), lambda i: (i, 0)),  # streamed row tiles
                pl.BlockSpec((1, P), lambda i: (0, 0)),   # constant index -> resident weight
            ],
            out_specs=pl.BlockSpec((tm, 1), lambda i: (i, 0)),
        ),
        compiler_params=pltpu.CompilerParams(
            dimension_semantics=_grid_semantics(),
            vmem_limit_bytes=min(vmem_cap // 2, 64 * 1024 * 1024),
        ),
        cost_estimate=cost,
    )(x, w)
    return out


def regularization(weight):
    # Matches OneLayer.regularization; tiny elementwise reduction, plain JAX.
    w2 = weight.astype(jnp.float32) ** 2
    return 0.01 * jnp.sum(w2 / (1.0 + w2))


if __name__ == "__main__":
    p = 10
    batch = 16

    key = jax.random.PRNGKey(0)
    kx, kw = jax.random.split(key)

    # Deterministic synthetic parameters (same shape as nn.Linear(p, 1).weight).
    weight = jax.random.normal(kw, (1, p), dtype=jnp.float32) * 0.1
    x = jax.random.normal(kx, (batch, p), dtype=jnp.float32)

    out = jax.block_until_ready(one_layer_forward(x, weight))
    ref = jax.nn.sigmoid(x @ weight.T)
    assert out.shape == (batch, 1)
    assert jnp.allclose(out, ref, atol=1e-5, rtol=1e-5)

    # Partial-last-block path (B not a multiple of the row tile; no jnp.pad).
    x_odd = jax.random.normal(key, (13, p), dtype=jnp.float32)
    out_odd = jax.block_until_ready(one_layer_forward(x_odd, weight, block_rows=8))
    ref_odd = jax.nn.sigmoid(x_odd @ weight.T)
    assert out_odd.shape == (13, 1)
    assert jnp.allclose(out_odd, ref_odd, atol=1e-5, rtol=1e-5)

    # Opt-in bf16 streaming path (halves HBM reads; f32 accumulation in-kernel).
    x_bf16 = x.astype(jnp.bfloat16)
    out_bf16 = jax.block_until_ready(one_layer_forward(x_bf16, weight))
    ref_bf16 = jax.nn.sigmoid(x_bf16.astype(jnp.float32) @ weight.T)
    assert jnp.allclose(out_bf16, ref_bf16, atol=5e-3, rtol=5e-3)

    _ = jax.block_until_ready(regularization(weight))

    print("KERNEL_OK")
</pallas_src>

<mosaic_0001>
module attributes {stable_mosaic.version = 11 : i64} {
  func.func @_one_layer_kernel(%arg0: i32, %arg1: memref<16x10xf32, #tpu.memory_space<vmem>>, %arg2: memref<1x10xf32, #tpu.memory_space<vmem>>, %arg3: memref<16x1xf32, #tpu.memory_space<vmem>>) attributes {dimension_semantics = [#tpu.dimension_semantics<parallel>], iteration_bounds = array<i64: 1>, scalar_prefetch = 0 : i64, scratch_operands = 0 : i64, tpu.core_type = #tpu.core_type<tc>, window_params = [{transform_indices = @transform_0, window_bounds = array<i64: 16, 10>}, {pipeline_mode = #tpu.pipeline_mode<synchronous>, transform_indices = @transform_1, window_bounds = array<i64: 1, 10>}, {transform_indices = @transform_2, window_bounds = array<i64: 16, 1>}]} {
    %c0 = arith.constant 0 : index
    %c0_0 = arith.constant 0 : index
    %0 = vector.load %arg1[%c0, %c0_0] : memref<16x10xf32, #tpu.memory_space<vmem>>, vector<16x10xf32>
    %c0_1 = arith.constant 0 : index
    %c0_2 = arith.constant 0 : index
    %1 = vector.load %arg2[%c0_1, %c0_2] : memref<1x10xf32, #tpu.memory_space<vmem>>, vector<1x10xf32>
    %2 = vector.broadcast %1 : vector<1x10xf32> to vector<16x10xf32>
    %3 = arith.mulf %0, %2 : vector<16x10xf32>
    %cst = arith.constant dense<0.000000e+00> : vector<16xf32>
    %4 = vector.multi_reduction <add>, %3, %cst [1] : vector<16x10xf32> to vector<16xf32>
    %5 = vector.shape_cast %4 : vector<16xf32> to vector<16x1xf32>
    %6 = arith.negf %5 : vector<16x1xf32>
    %7 = math.exp %6 : vector<16x1xf32>
    %cst_3 = arith.constant 1.000000e+00 : f32
    %8 = vector.broadcast %cst_3 : f32 to vector<16x1xf32>
    %9 = arith.addf %8, %7 : vector<16x1xf32>
    %10 = arith.divf %8, %9 : vector<16x1xf32>
    %c0_4 = arith.constant 0 : index
    %c0_5 = arith.constant 0 : index
    %11 = vector.load %arg3[%c0_4, %c0_5] : memref<16x1xf32, #tpu.memory_space<vmem>>, vector<16x1xf32>
    tpu.vector_store %arg3[%c0_4, %c0_5], %10 {strides = array<i32>} : memref<16x1xf32, #tpu.memory_space<vmem>>, vector<16x1xf32>,
    return
  }
  func.func @transform_0(%arg0: i32) -> (i32, i32) {
    %c0_i32 = arith.constant 0 : i32
    %c0_i32_0 = arith.constant 0 : i32
    return %arg0, %c0_i32 : i32, i32
  }
  func.func @transform_1(%arg0: i32) -> (i32, i32) {
    %c0_i32 = arith.constant 0 : i32
    %c0_i32_0 = arith.constant 0 : i32
    %c0_i32_1 = arith.constant 0 : i32
    return %c0_i32, %c0_i32_0 : i32, i32
  }
  func.func @transform_2(%arg0: i32) -> (i32, i32) {
    %c0_i32 = arith.constant 0 : i32
    %c0_i32_0 = arith.constant 0 : i32
    return %arg0, %c0_i32 : i32, i32
  }
}

</mosaic_0001>

<llo_original>
// kernel: tpu_custom_call.1
$region0: #{tpu_custom_call.1}
  #allocation0 [shape = 'u32[]', space=smem, size = 0x4, offset = 0x4, fixed_abs, tag = 'smem constant byte address 0x4 - core index']
  #allocation1 [shape = 'u32[144,128]{1,0:T(1,128)}', space=vmem, size = 0x12000, scoped, tag = 'internal scratch']
  %s0 = inlined_call_operand.hbm [shape: f32[16,10], index: 0, kind: input, shape index: {}]
  %s1 = inlined_call_operand.vmem [shape: f32[1,10], index: 1, kind: input, shape index: {}]
  %s2 = inlined_call_operand.vmem [shape: f32[16,1], index: 2, kind: output, shape index: {}]
  %s3 = sld [smem:[#allocation0]]
  $region22: #{tpu_custom_call.1} parent=0
    _
  %s5 = ssub.s32 1, %s3
  %s6 = scalar_select 0, %s5, %s3
  $region1: #{tpu_custom_call.1} parent=0
    #allocation2 [shape = 'u8[8192]{0}', space=vmem, size = 0x2000, scoped, tag = 'input window, operand 0, single buffered']
    #allocation3 [shape = 's32[1]{0}', space=sflag, size = 0x4, scoped, tag = 'scoped memory for tpu_custom_call.1']
    %7 = vsyncpa [#allocation3], 0
    // Predicated region
    $region2: #{tpu_custom_call.1} parent=1 // pred_check
      _
    $region3: #{tpu_custom_call.1} parent=1 // pred_check_branch
      %9 = sbr.rel (0) target = $region5
    $region4: #{tpu_custom_call.1} parent=1 // pred_region
      %s11 = ssub.s32 256, 256
      %12 = vsyncadd [#allocation3], %s11
      %s13 = sshll.u32 [#allocation2], 4
      %s14 = int_to_ptr.vmem [resolvable:$true] %s13
      %19 = dma.hbm_to_vmem [thread:$0]  %s0, 256, %s14, [#allocation3], 128, 128, 8
    $region5: #{tpu_custom_call.1} parent=1 // pred_fallthru
      _
    // Predicated region
    $region6: #{tpu_custom_call.1} parent=1 // pred_check
      _
    $region7: #{tpu_custom_call.1} parent=1 // pred_check_branch
      %21 = sbr.rel (0) target = $region9
    $region8: #{tpu_custom_call.1} parent=1 // pred_region
      _
    $region9: #{tpu_custom_call.1} parent=1 // pred_fallthru
      _
    // Predicated region
    $region10: #{tpu_custom_call.1} parent=1 // pred_check
      _
    $region11: #{tpu_custom_call.1} parent=1 // pred_check_branch
      %23 = sbr.rel (0) target = $region13
    $region12: #{tpu_custom_call.1} parent=1 // pred_region
      %24 = dma.done [#allocation3], 256
    $region13: #{tpu_custom_call.1} parent=1 // pred_fallthru
      _
    %v25 = vld [vmem:[#allocation2] sm:$0xff]
    %v26 = vld [vmem:[#allocation2 + $0x8] sm:$0xff]
    %v27 = vld [vmem:[%s1] sm:$0x1]
    %v29 = vlaneseq
    %v30 = vshrl.u32 %v29, 7
    %v31 = vsub.s32 0, %v30
    %v32 = vrot.slane %v27, %v31
    %v34 = vmul.f32 %v25, %v32
    %v35 = vmul.f32 %v26, %v32
    %vm36 = vcmask 80896
    %v37 = vsel %vm36, %v34, 0.0
    %38 = vadd.xlane.f32.xlu0 %v37
    %v39 = vpop.xlane.xlu0 %38
    %v40 = vsel %vm36, %v35, 0.0
    %41 = vadd.xlane.f32.xlu0 %v40
    %v42 = vpop.xlane.xlu0 %41
    %v43 = vxor.u32 %v39, 2147483648
    %v44 = vxor.u32 %v42, 2147483648
    %v45 = vmul.f32 %v43, 1.442695
    %v46 = vpow.pop %v45
    %v47 = vmul.f32 %v44, 1.442695
    %v48 = vpow.pop %v47
    %v49 = vadd.f32 %v46, 1.0
    %v50 = vadd.f32 %v48, 1.0
    %v51 = vrcp.pop %v49
    %v52 = vmul.f32 1.0, %v51
    %v53 = vrcp.pop %v50
    %v54 = vmul.f32 1.0, %v53
    %vm55 = vcmask 7168
    %56 = vst.msk [vmem:[%s2] sm:$0xff] %vm55, %v52
    %57 = vst.msk [vmem:[%s2 + $0x8] sm:$0xff] %vm55, %v54
    // Predicated region
    $region14: #{tpu_custom_call.1} parent=1 // pred_check
      _
    $region15: #{tpu_custom_call.1} parent=1 // pred_check_branch
      %59 = sbr.rel (0) target = $region17
    $region16: #{tpu_custom_call.1} parent=1 // pred_region
      _
    $region17: #{tpu_custom_call.1} parent=1 // pred_fallthru
      _
    // Predicated region
    $region18: #{tpu_custom_call.1} parent=1 // pred_check
      _
    $region19: #{tpu_custom_call.1} parent=1 // pred_check_branch
      %61 = sbr.rel (0) target = $region21
    $region20: #{tpu_custom_call.1} parent=1 // pred_region
      _
    $region21: #{tpu_custom_call.1} parent=1 // pred_fallthru
      _
    %62 = vsyncpa [#allocation3], 1

</llo_original>
